<compile_context>
chip_gen: v6e
topology: v6e:2x2x1
jax: 0.10.0
libtpu: 0.0.40
codegen_flags: <defaults>
</compile_context>

<pallas_src>
import functools

import numpy as np
import jax
import jax.numpy as jnp
from jax.experimental import pallas as pl
from jax.experimental.pallas import tpu as pltpu


def _ldam_kernel(probs_ref, target_ref, m_ref, out_ref, *, s):
    logits = probs_ref[...]            # (bn, C) f32 (raw logits)
    tgt = target_ref[...]              # (bn, 1) i32
    m = m_ref[...]                     # (1,  C) f32
    bn, c = logits.shape

    # one-hot(target) via iota compare (== scatter_ in the torch reference).
    col = jax.lax.broadcasted_iota(jnp.int32, (bn, c), 1)
    onehot = (col == tgt).astype(jnp.float32)

    # The margin only touches the target column, so subtract it elementwise:
    #   z = s * (logits - onehot * m)
    # (replaces the batch_m reduction + jnp.where of the reference with one mul+sub).
    z = s * (logits - onehot * m)

    # cross_entropy(z, target) per sample; mean / padding handled in the wrapper.
    zmax = jnp.max(z, axis=1, keepdims=True)
    lse = jnp.log(jnp.sum(jnp.exp(z - zmax), axis=1, keepdims=True)) + zmax
    tgt_logit = jnp.sum(z * onehot, axis=1, keepdims=True)
    out_ref[...] = lse - tgt_logit     # (bn, 1) per-sample loss


def _choose_block_n(n_pad, c):
    # Keep the double-buffered (bn, C) f32 logits tile <= ~16 MiB so the kernel fits
    # comfortably under scoped VMEM on every generation (v7x has only 64 MiB physical),
    # while staying >= 512 rows when possible to hide per-grid-step overhead.
    budget_bytes = 16 * 1024 * 1024
    max_rows = budget_bytes // (2 * 4 * max(c, 1))
    bn = min(n_pad, 2048, max(8, max_rows))
    return max(8, (bn // 8) * 8)


def ldam_loss(probs, target, m_list, s=30.0, block_n=None):
    """probs: (N, C) f32 logits; target: (N,) int; m_list: (C,) f32. Returns scalar mean loss."""
    n, c = probs.shape
    n8 = ((n + 7) // 8) * 8
    bn = block_n if block_n is not None else _choose_block_n(n8, c)
    bn = max(8, (min(bn, n8) // 8) * 8)
    n_pad = ((n + bn - 1) // bn) * bn

    probs_p = probs.astype(jnp.float32)
    target_p = target.astype(jnp.int32)
    if n_pad != n:
        probs_p = jnp.pad(probs_p, ((0, n_pad - n), (0, 0)))
        target_p = jnp.pad(target_p, (0, n_pad - n))   # padded rows sliced off below
    target2d = target_p.reshape(n_pad, 1)
    m2d = m_list.astype(jnp.float32).reshape(1, c)

    # TODO(synk): if production C << 128, pack 128//C samples per vreg row in the wrapper
    # (lane-dense layout) and use segmented lane reductions; kept classes-on-lanes here.
    kernel = functools.partial(_ldam_kernel, s=float(s))
    per_sample = pl.pallas_call(
        kernel,
        out_shape=jax.ShapeDtypeStruct((n_pad, 1), jnp.float32),
        grid=(n_pad // bn,),
        in_specs=[
            pl.BlockSpec((bn, c), lambda i: (i, 0)),
            pl.BlockSpec((bn, 1), lambda i: (i, 0)),
            pl.BlockSpec((1, c), lambda i: (0, 0)),
        ],
        out_specs=pl.BlockSpec((bn, 1), lambda i: (i, 0)),
        compiler_params=pltpu.CompilerParams(
            dimension_semantics=("parallel",),       # independent tiles -> 2 TCs on v7x
            vmem_limit_bytes=32 * 1024 * 1024,       # raise v5e's 16 MiB default; safe on v7x
        ),
        cost_estimate=pl.CostEstimate(
            flops=6 * n_pad * c,
            transcendentals=n_pad * c,
            bytes_accessed=n_pad * c * 4 + 2 * n_pad * 4 + c * 4,
        ),
    )(probs_p, target2d, m2d)

    # Mean over the true N rows only (padded rows never enter the sum).
    return jnp.sum(per_sample[:n, 0]) / n


def make_m_list(num_samples_per_cls, max_m=0.5):
    m = 1.0 / np.sqrt(np.sqrt(np.asarray(num_samples_per_cls, dtype=np.float64)))
    m = m * (max_m / np.max(m))
    return jnp.asarray(m, dtype=jnp.float32)


def _ldam_reference(probs, target, m_list, s=30.0):
    # pure-JAX reference for verification
    n, c = probs.shape
    onehot = jax.nn.one_hot(target, c, dtype=jnp.float32)
    batch_m = (onehot * m_list[None, :]).sum(axis=1, keepdims=True)
    output = jnp.where(onehot > 0, probs - batch_m, probs)
    z = s * output
    logp = jax.nn.log_softmax(z, axis=-1)
    return -jnp.mean(jnp.sum(logp * onehot, axis=-1))


if __name__ == "__main__":
    # TODO(synk): per-class `weight` for cross_entropy is None in this config; not implemented.
    key = jax.random.PRNGKey(0)
    C = 32
    num_samples_per_cls = [int(1000 // (i + 1)) for i in range(C)]   # imbalanced histogram
    m_list = make_m_list(num_samples_per_cls, max_m=0.5)

    # Case 1: batch divisible by the block (N=8, C=32).
    k1, k2, k3, k4 = jax.random.split(key, 4)
    probs_a = jax.random.normal(k1, (8, C), dtype=jnp.float32)       # logits
    target_a = jax.random.randint(k2, (8,), 0, C, dtype=jnp.int32)
    loss_a = ldam_loss(probs_a, target_a, m_list, s=30.0)
    jax.block_until_ready(loss_a)
    ref_a = _ldam_reference(probs_a, target_a, m_list, s=30.0)
    assert jnp.allclose(loss_a, ref_a, rtol=1e-5, atol=1e-5), (loss_a, ref_a)

    # Case 2: ragged batch (N=13) exercises the padding + masked-mean path.
    probs_b = jax.random.normal(k3, (13, C), dtype=jnp.float32)
    target_b = jax.random.randint(k4, (13,), 0, C, dtype=jnp.int32)
    loss_b = ldam_loss(probs_b, target_b, m_list, s=30.0)
    jax.block_until_ready(loss_b)
    ref_b = _ldam_reference(probs_b, target_b, m_list, s=30.0)
    assert jnp.allclose(loss_b, ref_b, rtol=1e-5, atol=1e-5), (loss_b, ref_b)

    print("KERNEL_OK")
</pallas_src>

<mosaic_0001>
module attributes {stable_mosaic.version = 11 : i64} {
  func.func @_ldam_kernel(%arg0: i32, %arg1: memref<8x32xf32, #tpu.memory_space<vmem>>, %arg2: memref<8x1xi32, #tpu.memory_space<vmem>>, %arg3: memref<1x32xf32, #tpu.memory_space<vmem>>, %arg4: memref<8x1xf32, #tpu.memory_space<vmem>>) attributes {dimension_semantics = [#tpu.dimension_semantics<parallel>], iteration_bounds = array<i64: 1>, scalar_prefetch = 0 : i64, scratch_operands = 0 : i64, tpu.core_type = #tpu.core_type<tc>, window_params = [{transform_indices = @transform_0, window_bounds = array<i64: 8, 32>}, {transform_indices = @transform_1, window_bounds = array<i64: 8, 1>}, {pipeline_mode = #tpu.pipeline_mode<synchronous>, transform_indices = @transform_2, window_bounds = array<i64: 1, 32>}, {transform_indices = @transform_3, window_bounds = array<i64: 8, 1>}]} {
    %c0 = arith.constant 0 : index
    %c0_0 = arith.constant 0 : index
    %0 = vector.load %arg1[%c0, %c0_0] : memref<8x32xf32, #tpu.memory_space<vmem>>, vector<8x32xf32>
    %c0_1 = arith.constant 0 : index
    %c0_2 = arith.constant 0 : index
    %1 = vector.load %arg2[%c0_1, %c0_2] : memref<8x1xi32, #tpu.memory_space<vmem>>, vector<8x1xi32>
    %c0_3 = arith.constant 0 : index
    %c0_4 = arith.constant 0 : index
    %2 = vector.load %arg3[%c0_3, %c0_4] : memref<1x32xf32, #tpu.memory_space<vmem>>, vector<1x32xf32>
    %3 = tpu.iota {dimensions = array<i32: 1>} : vector<8x32xi32>
    %4 = vector.broadcast %1 : vector<8x1xi32> to vector<8x32xi32>
    %5 = arith.cmpi eq, %3, %4 : vector<8x32xi32>
    %6 = arith.extui %5 : vector<8x32xi1> to vector<8x32xi32>
    %7 = arith.sitofp %6 : vector<8x32xi32> to vector<8x32xf32>
    %8 = vector.broadcast %2 : vector<1x32xf32> to vector<8x32xf32>
    %9 = arith.mulf %7, %8 : vector<8x32xf32>
    %10 = arith.subf %0, %9 : vector<8x32xf32>
    %cst = arith.constant 3.000000e+01 : f32
    %11 = vector.broadcast %cst : f32 to vector<8x32xf32>
    %12 = arith.mulf %11, %10 : vector<8x32xf32>
    %cst_5 = arith.constant dense<0xFF800000> : vector<8xf32>
    %13 = vector.multi_reduction <maximumf>, %12, %cst_5 [1] : vector<8x32xf32> to vector<8xf32>
    %14 = vector.shape_cast %13 : vector<8xf32> to vector<8x1xf32>
    %15 = vector.broadcast %14 : vector<8x1xf32> to vector<8x32xf32>
    %16 = arith.subf %12, %15 : vector<8x32xf32>
    %17 = math.exp %16 : vector<8x32xf32>
    %cst_6 = arith.constant dense<0.000000e+00> : vector<8xf32>
    %18 = vector.multi_reduction <add>, %17, %cst_6 [1] : vector<8x32xf32> to vector<8xf32>
    %19 = vector.shape_cast %18 : vector<8xf32> to vector<8x1xf32>
    %20 = math.log %19 : vector<8x1xf32>
    %21 = arith.addf %20, %14 : vector<8x1xf32>
    %22 = arith.mulf %12, %7 : vector<8x32xf32>
    %cst_7 = arith.constant dense<0.000000e+00> : vector<8xf32>
    %23 = vector.multi_reduction <add>, %22, %cst_7 [1] : vector<8x32xf32> to vector<8xf32>
    %24 = vector.shape_cast %23 : vector<8xf32> to vector<8x1xf32>
    %25 = arith.subf %21, %24 : vector<8x1xf32>
    %c0_8 = arith.constant 0 : index
    %c0_9 = arith.constant 0 : index
    %26 = vector.load %arg4[%c0_8, %c0_9] : memref<8x1xf32, #tpu.memory_space<vmem>>, vector<8x1xf32>
    tpu.vector_store %arg4[%c0_8, %c0_9], %25 {strides = array<i32>} : memref<8x1xf32, #tpu.memory_space<vmem>>, vector<8x1xf32>,
    return
  }
  func.func @transform_0(%arg0: i32) -> (i32, i32) {
    %c0_i32 = arith.constant 0 : i32
    %c0_i32_0 = arith.constant 0 : i32
    return %arg0, %c0_i32 : i32, i32
  }
  func.func @transform_1(%arg0: i32) -> (i32, i32) {
    %c0_i32 = arith.constant 0 : i32
    %c0_i32_0 = arith.constant 0 : i32
    return %arg0, %c0_i32 : i32, i32
  }
  func.func @transform_2(%arg0: i32) -> (i32, i32) {
    %c0_i32 = arith.constant 0 : i32
    %c0_i32_0 = arith.constant 0 : i32
    %c0_i32_1 = arith.constant 0 : i32
    return %c0_i32, %c0_i32_0 : i32, i32
  }
  func.func @transform_3(%arg0: i32) -> (i32, i32) {
    %c0_i32 = arith.constant 0 : i32
    %c0_i32_0 = arith.constant 0 : i32
    return %arg0, %c0_i32 : i32, i32
  }
}

</mosaic_0001>

<llo_original>
// kernel: tpu_custom_call.1
$region0: #{tpu_custom_call.1}
  #allocation0 [shape = 'u32[]', space=smem, size = 0x4, offset = 0x4, fixed_abs, tag = 'smem constant byte address 0x4 - core index']
  #allocation1 [shape = 'u32[144,128]{1,0:T(1,128)}', space=vmem, size = 0x12000, scoped, tag = 'internal scratch']
  %s0 = inlined_call_operand.vmem [shape: f32[8,32], index: 0, kind: input, shape index: {}]
  %s1 = inlined_call_operand.vmem [shape: s32[8,1], index: 1, kind: input, shape index: {}]
  %s2 = inlined_call_operand.vmem [shape: f32[1,32], index: 2, kind: input, shape index: {}]
  %s3 = inlined_call_operand.vmem [shape: f32[8,1], index: 3, kind: output, shape index: {}]
  %s4 = sld [smem:[#allocation0]]
  $region22: #{tpu_custom_call.1} parent=0
    _
  %s6 = ssub.s32 1, %s4
  %s7 = scalar_select 0, %s6, %s4
  // Predicated region
  $region2: #{tpu_custom_call.1} parent=0 // pred_check
    _
  $region3: #{tpu_custom_call.1} parent=0 // pred_check_branch
    %9 = sbr.rel (0) target = $region5
  $region4: #{tpu_custom_call.1} parent=0 // pred_region
    _
  $region5: #{tpu_custom_call.1} parent=0 // pred_fallthru
    _
  // Predicated region
  $region6: #{tpu_custom_call.1} parent=0 // pred_check
    _
  $region7: #{tpu_custom_call.1} parent=0 // pred_check_branch
    %11 = sbr.rel (0) target = $region9
  $region8: #{tpu_custom_call.1} parent=0 // pred_region
    _
  $region9: #{tpu_custom_call.1} parent=0 // pred_fallthru
    _
  // Predicated region
  $region10: #{tpu_custom_call.1} parent=0 // pred_check
    _
  $region11: #{tpu_custom_call.1} parent=0 // pred_check_branch
    %13 = sbr.rel (0) target = $region13
  $region12: #{tpu_custom_call.1} parent=0 // pred_region
    _
  $region13: #{tpu_custom_call.1} parent=0 // pred_fallthru
    _
  %v14 = vld [vmem:[%s0] sm:$0xff]
  %v15 = vld [vmem:[%s1] sm:$0xff]
  %v16 = vld [vmem:[%s2] sm:$0x1]
  %v17 = vlaneseq
  %v18 = vand.u32 %v17, 127
  %19 = vset.pattern.permute.xlu0 0
  %20 = vperm.xlu0 %19, %v15
  %v21 = vpop.permute.xlu0 %20
  %vm22 = vcmp.eq.s32.totalorder %v18, %v21
  %v23 = vsel %vm22, 1, 0
  %v24 = vcvt.s32.f32 %v23
  %v26 = vlaneseq
  %v27 = vshrl.u32 %v26, 7
  %v28 = vsub.s32 0, %v27
  %v29 = vrot.slane %v16, %v28
  %v31 = vmul.f32 %v24, %v29
  %v32 = vsub.f32 %v14, %v31
  %v33 = vmul.f32 %v32, 30.0
  %vm34 = vcmask 261120
  %v35 = vsel %vm34, %v33, -inf
  %36 = vmax.xlane.f32.xlu0 %v35
  %v37 = vpop.xlane.xlu0 %36
  %v38 = vsub.f32 %v33, %v37
  %v39 = vmul.f32 %v38, 1.442695
  %v40 = vpow.pop %v39
  %v41 = vsel %vm34, %v40, 0.0
  %42 = vadd.xlane.f32.xlu0 %v41
  %v43 = vpop.xlane.xlu0 %42
  %v44 = vlog2.pop %v43
  %v45 = vmul.f32 %v44, 0.6931472
  %v46 = vadd.f32 %v45, %v37
  %v47 = vmul.f32 %v33, %v24
  %v48 = vsel %vm34, %v47, 0.0
  %49 = vadd.xlane.f32.xlu0 %v48
  %v50 = vpop.xlane.xlu0 %49
  %v51 = vsub.f32 %v46, %v50
  %vm52 = vcmask 7168
  %53 = vst.msk [vmem:[%s3] sm:$0xff] %vm52, %v51
  // Predicated region
  $region14: #{tpu_custom_call.1} parent=0 // pred_check
    _
  $region15: #{tpu_custom_call.1} parent=0 // pred_check_branch
    %55 = sbr.rel (0) target = $region17
  $region16: #{tpu_custom_call.1} parent=0 // pred_region
    _
  $region17: #{tpu_custom_call.1} parent=0 // pred_fallthru
    _
  // Predicated region
  $region18: #{tpu_custom_call.1} parent=0 // pred_check
    _
  $region19: #{tpu_custom_call.1} parent=0 // pred_check_branch
    %57 = sbr.rel (0) target = $region21
  $region20: #{tpu_custom_call.1} parent=0 // pred_region
    _
  $region21: #{tpu_custom_call.1} parent=0 // pred_fallthru
    _

</llo_original>
